<compile_context>
chip_gen: v5e
topology: v5e:2x2
jax: 0.10.0
libtpu: 0.0.40
codegen_flags: <defaults>
</compile_context>

<pallas_src>
import jax
import jax.numpy as jnp
from jax.experimental import pallas as pl
from jax.experimental.pallas import tpu as pltpu


def _mlp_kernel(xt_ref, w1_ref, b1_ref, w2_ref, b2_ref, w3_ref, b3_ref,
                w4_ref, b4_ref, o_ref):
    """Feature-major 4-layer MLP on one lane-dense batch tile.

    xt_ref : (11, T)  bf16  input tile, batch on lanes
    w1..w3 : PyTorch (out, in) weights, bf16
    b1..b3 : (out, 1) f32 biases
    w4_ref : (32, 1)  f32  final-layer weight column
    b4_ref : (1, 1)   f32
    o_ref  : (1, T)   f32  lane-dense output tile
    """
    xt = xt_ref[...]                                             # (11, T) bf16

    # fc1: (128, 11) @ (11, T) -> (128, T), f32 accumulation on the MXU.
    h = jnp.dot(w1_ref[...], xt, preferred_element_type=jnp.float32)
    h = jnp.maximum(h + b1_ref[...], 0.0)

    # fc2: (64, 128) @ (128, T) -> (64, T)
    h = jnp.dot(w2_ref[...], h.astype(jnp.bfloat16),
                preferred_element_type=jnp.float32)
    h = jnp.maximum(h + b2_ref[...], 0.0)

    # fc3: (32, 64) @ (64, T) -> (32, T)
    h = jnp.dot(w3_ref[...], h.astype(jnp.bfloat16),
                preferred_element_type=jnp.float32)
    h = jnp.maximum(h + b3_ref[...], 0.0)

    # fc4 (32 -> 1): VPU multiply + sublane reduction instead of an N=1 MXU pass;
    # result is already the lane-dense (1, T) output.
    out = jnp.sum(h * w4_ref[...], axis=0, keepdims=True) + b4_ref[...]
    o_ref[...] = out.astype(o_ref.dtype)


def insurance_model_forward(x, params, *, batch_tile=1024):
    """x: (B, 11) float32. params: PyTorch-layout weights/biases. Returns (B, 1) f32.

    batch_tile must be a multiple of 128.  For very large batches 2048-8192 may be
    slightly better (re-derive against v7x's smaller VMEM); 1024 is safe on all gens.
    """
    B, in_dim = x.shape
    assert in_dim == 11
    assert batch_tile % 128 == 0, "batch_tile must be a multiple of 128 (lane width)"

    n_tiles = pl.cdiv(B, batch_tile)
    Bp = n_tiles * batch_tile

    # bf16 operands for the MXU; pad ragged batches; feature-major (lane-dense) layout.
    x_bf = x.astype(jnp.bfloat16)
    if Bp != B:
        x_bf = jnp.pad(x_bf, ((0, Bp - B), (0, 0)))
    xt = x_bf.T                                                  # (11, Bp)

    w1 = params["w1"].astype(jnp.bfloat16)                       # (128, 11)
    w2 = params["w2"].astype(jnp.bfloat16)                       # (64, 128)
    w3 = params["w3"].astype(jnp.bfloat16)                       # (32, 64)
    b1 = params["b1"].reshape(128, 1).astype(jnp.float32)
    b2 = params["b2"].reshape(64, 1).astype(jnp.float32)
    b3 = params["b3"].reshape(32, 1).astype(jnp.float32)
    w4 = params["w4"].reshape(1, 32).T.astype(jnp.float32)       # (32, 1)
    b4 = params["b4"].reshape(1, 1).astype(jnp.float32)

    def full_spec(arr):
        # Full-array block with a constant block index: fetched once, resident in
        # VMEM for the whole grid (no per-step DMA for the ~47 KB of weights).
        return pl.BlockSpec(arr.shape, lambda i: (0,) * arr.ndim)

    out = pl.pallas_call(
        _mlp_kernel,
        out_shape=jax.ShapeDtypeStruct((1, Bp), jnp.float32),
        grid_spec=pltpu.PrefetchScalarGridSpec(
            num_scalar_prefetch=0,
            grid=(n_tiles,),
            in_specs=[
                pl.BlockSpec((11, batch_tile), lambda i: (0, i)),
                full_spec(w1), full_spec(b1),
                full_spec(w2), full_spec(b2),
                full_spec(w3), full_spec(b3),
                full_spec(w4), full_spec(b4),
            ],
            out_specs=pl.BlockSpec((1, batch_tile), lambda i: (0, i)),
        ),
        compiler_params=pltpu.CompilerParams(
            dimension_semantics=("parallel",),   # megacore-splittable on v7x
        ),
    )(xt, w1, b1, w2, b2, w3, b3, w4, b4)

    return out[:, :B].reshape(B, 1)


def init_params(key):
    """PyTorch nn.Linear default init (uniform +-1/sqrt(fan_in)) in PyTorch layout:
    weight (out_features, in_features), bias (out_features,)."""
    dims = [(11, 128), (128, 64), (64, 32), (32, 1)]
    params = {}
    keys = jax.random.split(key, 2 * len(dims))
    for idx, (fan_in, fan_out) in enumerate(dims):
        bound = 1.0 / float(fan_in) ** 0.5
        w = jax.random.uniform(keys[2 * idx], (fan_out, fan_in),
                               minval=-bound, maxval=bound, dtype=jnp.float32)
        b = jax.random.uniform(keys[2 * idx + 1], (fan_out,),
                               minval=-bound, maxval=bound, dtype=jnp.float32)
        params[f"w{idx + 1}"] = w
        params[f"b{idx + 1}"] = b
    return params


def _reference_forward(x, params):
    """Pure-JAX reference emulating the kernel's math (bf16 operands, f32 accum)."""
    def linear_bf16(h, w, b):
        return jnp.dot(h.astype(jnp.bfloat16), w.astype(jnp.bfloat16).T,
                       preferred_element_type=jnp.float32) + b

    h = jnp.maximum(linear_bf16(x, params["w1"], params["b1"]), 0.0)
    h = jnp.maximum(linear_bf16(h, params["w2"], params["b2"]), 0.0)
    h = jnp.maximum(linear_bf16(h, params["w3"], params["b3"]), 0.0)
    return jnp.dot(h, params["w4"].T,
                   preferred_element_type=jnp.float32) + params["b4"]


if __name__ == "__main__":
    key = jax.random.PRNGKey(0)
    pkey, xkey = jax.random.split(key)

    params = init_params(pkey)

    B = 2500  # deliberately ragged: exercises padding + a multi-step grid (5 x 512)
    x = jax.random.normal(xkey, (B, 11), dtype=jnp.float32)

    out = insurance_model_forward(x, params, batch_tile=512)
    out = jax.block_until_ready(out)

    ref = _reference_forward(x, params)
    assert out.shape == (B, 1)
    max_err = float(jnp.max(jnp.abs(out - ref)))
    assert jnp.allclose(out, ref, atol=2e-3, rtol=2e-3), \
        f"mismatch vs pure-JAX reference, max_err={max_err}"

    print("KERNEL_OK")
</pallas_src>

<mosaic_0001>
module attributes {stable_mosaic.version = 11 : i64} {
  func.func @_mlp_kernel(%arg0: i32, %arg1: memref<11x512xbf16, #tpu.memory_space<vmem>>, %arg2: memref<128x11xbf16, #tpu.memory_space<vmem>>, %arg3: memref<128x1xf32, #tpu.memory_space<vmem>>, %arg4: memref<64x128xbf16, #tpu.memory_space<vmem>>, %arg5: memref<64x1xf32, #tpu.memory_space<vmem>>, %arg6: memref<32x64xbf16, #tpu.memory_space<vmem>>, %arg7: memref<32x1xf32, #tpu.memory_space<vmem>>, %arg8: memref<32x1xf32, #tpu.memory_space<vmem>>, %arg9: memref<1x1xf32, #tpu.memory_space<vmem>>, %arg10: memref<1x512xf32, #tpu.memory_space<vmem>>) attributes {dimension_semantics = [#tpu.dimension_semantics<parallel>], iteration_bounds = array<i64: 5>, scalar_prefetch = 0 : i64, scratch_operands = 0 : i64, tpu.core_type = #tpu.core_type<tc>, window_params = [{transform_indices = @transform_0, window_bounds = array<i64: 11, 512>}, {pipeline_mode = #tpu.pipeline_mode<synchronous>, transform_indices = @transform_1, window_bounds = array<i64: 128, 11>}, {pipeline_mode = #tpu.pipeline_mode<synchronous>, transform_indices = @transform_2, window_bounds = array<i64: 128, 1>}, {pipeline_mode = #tpu.pipeline_mode<synchronous>, transform_indices = @transform_3, window_bounds = array<i64: 64, 128>}, {pipeline_mode = #tpu.pipeline_mode<synchronous>, transform_indices = @transform_4, window_bounds = array<i64: 64, 1>}, {pipeline_mode = #tpu.pipeline_mode<synchronous>, transform_indices = @transform_5, window_bounds = array<i64: 32, 64>}, {pipeline_mode = #tpu.pipeline_mode<synchronous>, transform_indices = @transform_6, window_bounds = array<i64: 32, 1>}, {pipeline_mode = #tpu.pipeline_mode<synchronous>, transform_indices = @transform_7, window_bounds = array<i64: 32, 1>}, {pipeline_mode = #tpu.pipeline_mode<synchronous>, transform_indices = @transform_8, window_bounds = array<i64: 1, 1>}, {transform_indices = @transform_9, window_bounds = array<i64: 1, 512>}]} {
    %c0 = arith.constant 0 : index
    %c0_0 = arith.constant 0 : index
    %0 = vector.load %arg1[%c0, %c0_0] : memref<11x512xbf16, #tpu.memory_space<vmem>>, vector<11x512xbf16>
    %c0_1 = arith.constant 0 : index
    %c0_2 = arith.constant 0 : index
    %1 = vector.load %arg2[%c0_1, %c0_2] : memref<128x11xbf16, #tpu.memory_space<vmem>>, vector<128x11xbf16>
    %cst = arith.constant dense<0.000000e+00> : vector<128x512xf32>
    %2 = tpu.matmul %1, %0, %cst {dimension_numbers = #tpu.dot_dimension_numbers<[1], [0], [0], [1], [0, 0, 1, 1], [], []>} : vector<128x11xbf16>, vector<11x512xbf16>, vector<128x512xf32> -> vector<128x512xf32>
    %c0_3 = arith.constant 0 : index
    %c0_4 = arith.constant 0 : index
    %3 = vector.load %arg3[%c0_3, %c0_4] : memref<128x1xf32, #tpu.memory_space<vmem>>, vector<128x1xf32>
    %4 = vector.broadcast %3 : vector<128x1xf32> to vector<128x512xf32>
    %5 = arith.addf %2, %4 : vector<128x512xf32>
    %cst_5 = arith.constant 0.000000e+00 : f32
    %6 = vector.broadcast %cst_5 : f32 to vector<128x512xf32>
    %7 = arith.maximumf %5, %6 : vector<128x512xf32>
    %c0_6 = arith.constant 0 : index
    %c0_7 = arith.constant 0 : index
    %8 = vector.load %arg4[%c0_6, %c0_7] : memref<64x128xbf16, #tpu.memory_space<vmem>>, vector<64x128xbf16>
    %9 = arith.truncf %7 : vector<128x512xf32> to vector<128x512xbf16>
    %cst_8 = arith.constant dense<0.000000e+00> : vector<64x512xf32>
    %10 = tpu.matmul %8, %9, %cst_8 {dimension_numbers = #tpu.dot_dimension_numbers<[1], [0], [0], [1], [0, 0, 1, 1], [], []>} : vector<64x128xbf16>, vector<128x512xbf16>, vector<64x512xf32> -> vector<64x512xf32>
    %c0_9 = arith.constant 0 : index
    %c0_10 = arith.constant 0 : index
    %11 = vector.load %arg5[%c0_9, %c0_10] : memref<64x1xf32, #tpu.memory_space<vmem>>, vector<64x1xf32>
    %12 = vector.broadcast %11 : vector<64x1xf32> to vector<64x512xf32>
    %13 = arith.addf %10, %12 : vector<64x512xf32>
    %cst_11 = arith.constant 0.000000e+00 : f32
    %14 = vector.broadcast %cst_11 : f32 to vector<64x512xf32>
    %15 = arith.maximumf %13, %14 : vector<64x512xf32>
    %c0_12 = arith.constant 0 : index
    %c0_13 = arith.constant 0 : index
    %16 = vector.load %arg6[%c0_12, %c0_13] : memref<32x64xbf16, #tpu.memory_space<vmem>>, vector<32x64xbf16>
    %17 = arith.truncf %15 : vector<64x512xf32> to vector<64x512xbf16>
    %cst_14 = arith.constant dense<0.000000e+00> : vector<32x512xf32>
    %18 = tpu.matmul %16, %17, %cst_14 {dimension_numbers = #tpu.dot_dimension_numbers<[1], [0], [0], [1], [0, 0, 1, 1], [], []>} : vector<32x64xbf16>, vector<64x512xbf16>, vector<32x512xf32> -> vector<32x512xf32>
    %c0_15 = arith.constant 0 : index
    %c0_16 = arith.constant 0 : index
    %19 = vector.load %arg7[%c0_15, %c0_16] : memref<32x1xf32, #tpu.memory_space<vmem>>, vector<32x1xf32>
    %20 = vector.broadcast %19 : vector<32x1xf32> to vector<32x512xf32>
    %21 = arith.addf %18, %20 : vector<32x512xf32>
    %cst_17 = arith.constant 0.000000e+00 : f32
    %22 = vector.broadcast %cst_17 : f32 to vector<32x512xf32>
    %23 = arith.maximumf %21, %22 : vector<32x512xf32>
    %c0_18 = arith.constant 0 : index
    %c0_19 = arith.constant 0 : index
    %24 = vector.load %arg8[%c0_18, %c0_19] : memref<32x1xf32, #tpu.memory_space<vmem>>, vector<32x1xf32>
    %25 = vector.broadcast %24 : vector<32x1xf32> to vector<32x512xf32>
    %26 = arith.mulf %23, %25 : vector<32x512xf32>
    %cst_20 = arith.constant dense<0.000000e+00> : vector<512xf32>
    %27 = vector.multi_reduction <add>, %26, %cst_20 [0] : vector<32x512xf32> to vector<512xf32>
    %28 = vector.shape_cast %27 : vector<512xf32> to vector<1x512xf32>
    %c0_21 = arith.constant 0 : index
    %c0_22 = arith.constant 0 : index
    %29 = vector.load %arg9[%c0_21, %c0_22] : memref<1x1xf32, #tpu.memory_space<vmem>>, vector<1x1xf32>
    %30 = vector.broadcast %29 : vector<1x1xf32> to vector<1x512xf32>
    %31 = arith.addf %28, %30 : vector<1x512xf32>
    %c0_23 = arith.constant 0 : index
    %c0_24 = arith.constant 0 : index
    %32 = vector.load %arg10[%c0_23, %c0_24] : memref<1x512xf32, #tpu.memory_space<vmem>>, vector<1x512xf32>
    tpu.vector_store %arg10[%c0_23, %c0_24], %31 {strides = array<i32>} : memref<1x512xf32, #tpu.memory_space<vmem>>, vector<1x512xf32>,
    return
  }
  func.func @transform_0(%arg0: i32) -> (i32, i32) {
    %c0_i32 = arith.constant 0 : i32
    %c0_i32_0 = arith.constant 0 : i32
    return %c0_i32, %arg0 : i32, i32
  }
  func.func @transform_1(%arg0: i32) -> (i32, i32) {
    %c0_i32 = arith.constant 0 : i32
    %c0_i32_0 = arith.constant 0 : i32
    %c0_i32_1 = arith.constant 0 : i32
    return %c0_i32, %c0_i32_0 : i32, i32
  }
  func.func @transform_2(%arg0: i32) -> (i32, i32) {
    %c0_i32 = arith.constant 0 : i32
    %c0_i32_0 = arith.constant 0 : i32
    %c0_i32_1 = arith.constant 0 : i32
    return %c0_i32, %c0_i32_0 : i32, i32
  }
  func.func @transform_3(%arg0: i32) -> (i32, i32) {
    %c0_i32 = arith.constant 0 : i32
    %c0_i32_0 = arith.constant 0 : i32
    %c0_i32_1 = arith.constant 0 : i32
    return %c0_i32, %c0_i32_0 : i32, i32
  }
  func.func @transform_4(%arg0: i32) -> (i32, i32) {
    %c0_i32 = arith.constant 0 : i32
    %c0_i32_0 = arith.constant 0 : i32
    %c0_i32_1 = arith.constant 0 : i32
    return %c0_i32, %c0_i32_0 : i32, i32
  }
  func.func @transform_5(%arg0: i32) -> (i32, i32) {
    %c0_i32 = arith.constant 0 : i32
    %c0_i32_0 = arith.constant 0 : i32
    %c0_i32_1 = arith.constant 0 : i32
    return %c0_i32, %c0_i32_0 : i32, i32
  }
  func.func @transform_6(%arg0: i32) -> (i32, i32) {
    %c0_i32 = arith.constant 0 : i32
    %c0_i32_0 = arith.constant 0 : i32
    %c0_i32_1 = arith.constant 0 : i32
    return %c0_i32, %c0_i32_0 : i32, i32
  }
  func.func @transform_7(%arg0: i32) -> (i32, i32) {
    %c0_i32 = arith.constant 0 : i32
    %c0_i32_0 = arith.constant 0 : i32
    %c0_i32_1 = arith.constant 0 : i32
    return %c0_i32, %c0_i32_0 : i32, i32
  }
  func.func @transform_8(%arg0: i32) -> (i32, i32) {
    %c0_i32 = arith.constant 0 : i32
    %c0_i32_0 = arith.constant 0 : i32
    %c0_i32_1 = arith.constant 0 : i32
    return %c0_i32, %c0_i32_0 : i32, i32
  }
  func.func @transform_9(%arg0: i32) -> (i32, i32) {
    %c0_i32 = arith.constant 0 : i32
    %c0_i32_0 = arith.constant 0 : i32
    return %c0_i32, %arg0 : i32, i32
  }
}

</mosaic_0001>

<llo_original>
// kernel: tpu_custom_call.1
$region0: #{tpu_custom_call.1}
  #allocation0 [shape = 'u32[]', space=smem, size = 0x4, offset = 0x4, fixed_abs, tag = 'smem constant byte address 0x4 - core index']
  #allocation1 [shape = 'u32[72,128]{1,0:T(1,128)}', space=vmem, size = 0x9000, scoped, tag = 'internal scratch']
  #allocation2 [shape = 'f32[1,1]{1,0:T(1,128)S(1)}', space=vmem, size = 0x200, scoped, tag = 'scoped memory for tpu_custom_call.1']
  %s0 = inlined_call_operand.vmem [shape: bf16[11,2560], index: 0, kind: input, shape index: {}]
  %s1 = inlined_call_operand.vmem [shape: bf16[128,11], index: 1, kind: input, shape index: {}]
  %s2 = inlined_call_operand.vmem [shape: f32[128,1], index: 2, kind: input, shape index: {}]
  %s3 = inlined_call_operand.vmem [shape: bf16[64,128], index: 3, kind: input, shape index: {}]
  %s4 = inlined_call_operand.vmem [shape: f32[64,1], index: 4, kind: input, shape index: {}]
  %s5 = inlined_call_operand.vmem [shape: bf16[32,64], index: 5, kind: input, shape index: {}]
  %s6 = inlined_call_operand.vmem [shape: f32[32,1], index: 6, kind: input, shape index: {}]
  %s7 = inlined_call_operand.vmem [shape: f32[32,1], index: 7, kind: input, shape index: {}]
  %s8 = inlined_call_operand.<no memory space> [shape: f32[1,1], index: 8, kind: input, shape index: {}]
  %s9 = inlined_call_operand.hbm [shape: f32[1,2560], index: 9, kind: output, shape index: {}]
  %s10 = sld [smem:[#allocation0]]
  $region92: #{tpu_custom_call.1} parent=0
    _
  %s12 = ssub.s32 1, %s10
  %s13 = scalar_select 0, %s12, %s10
  %v14 = vstv %s8
  %15 = vst [vmem:[#allocation2] sm:$0x1] %v14
  $region1: #{tpu_custom_call.1} parent=0
    #allocation3 [shape = 'u8[32768]{0}', space=vmem, size = 0x8000, scoped, tag = 'input window, operand 0']
    #allocation4 [shape = 'u8[4096]{0}', space=vmem, size = 0x1000, scoped, tag = 'output window, operand 0']
    #allocation5 [shape = 's32[2]{0}', space=sflag, size = 0x8, scoped, tag = 'scoped memory for tpu_custom_call.1']
    %16 = vsyncpa [#allocation5], 0
    %s17 = scalar_lea.sflag [#allocation5], 1
    %18 = vsyncpa %s17, 0
    loop: start=0, step=1, limit=7
    $region2: #{tpu_custom_call.1} parent=1 // loop_pre_header
      _
    $region3: #{tpu_custom_call.1} parent=1 // loop_header
      %s20 = sphi 0, %s24
      %p21 = scmp.ge.s32.totalorder %s20, 7
      %s30 = sphi 0, %s32
      %s33 = sphi 0, %s30
      %s34 = sphi 0, %s33
      %s50 = sphi 0, %s34
      %s54 = sphi 0, %s54
      %s56 = sphi 0, %s54
      %s57 = sphi 0, %s56
      %s71 = sphi 0, %s57
      %s75 = sphi 0, %s75
      %s77 = sphi 0, %s75
      %s78 = sphi 0, %s77
      %s92 = sphi 0, %s78
      %s96 = sphi 0, %s96
      %s98 = sphi 0, %s96
      %s99 = sphi 0, %s98
      %s113 = sphi 0, %s99
      %s117 = sphi 0, %s117
      %s119 = sphi 0, %s117
      %s120 = sphi 0, %s119
      %s134 = sphi 0, %s120
      %s138 = sphi 0, %s138
      %s140 = sphi 0, %s138
      %s141 = sphi 0, %s140
      %s155 = sphi 0, %s141
      %s159 = sphi 0, %s159
      %s161 = sphi 0, %s159
      %s162 = sphi 0, %s161
      %s176 = sphi 0, %s162
      %s180 = sphi 0, %s180
      %s182 = sphi 0, %s180
      %s183 = sphi 0, %s182
      %s197 = sphi 0, %s183
      %s201 = sphi 0, %s201
      %s203 = sphi 0, %s201
      %s204 = sphi 0, %s203
      %s218 = sphi 0, %s204
      %s224 = sphi 0, %s226
      %s227 = sphi 0, %s224
      %s228 = sphi 0, %s227
      %s244 = sphi 0, %s228
    $region4: #{tpu_custom_call.1} parent=1 // loop_header_branch
      %23 = sbr.rel (%p21) target = $region8
    $region5: #{tpu_custom_call.1} parent=1 // loop_body
      %s25 = ssub.s32 %s20, 1
      %s26 = ssub.s32 %s20, 2
      %s27 = sadd.s32 %s20, 1
      %s28 = ssub.s32 %s20, %s27
      %p29 = scmp.eq.s32.totalorder %s28, 0
      %s31 = sadd.s32 %s30, 1
      %s32 = scalar_select %p29, %s30, %s31
      %p35 = pneg %p29
      %p36 = scmp.eq.s32.totalorder %s20, 4
      %p37 = por %p35, %p36
      %p38 = scmp.ne.s32.totalorder %s30, %s33
      %p39 = scmp.eq.s32.totalorder %s20, 0
      %p40 = por %p38, %p39
      %p41 = scmp.ne.s32.totalorder %s30, %s33
      %p42 = scmp.eq.s32.totalorder %s25, 4
      %p43 = por %p41, %p42
      %p44 = scmp.ne.s32.totalorder %s33, %s34
      %p45 = scmp.eq.s32.totalorder %s25, 0
      %p46 = por %p44, %p45
      %p47 = scmp.ne.s32.totalorder %s33, %s34
      %p48 = scmp.eq.s32.totalorder %s26, 4
      %p49 = por %p47, %p48
      %p51 = scmp.ne.s32.totalorder %s34, %s50
      %p52 = scmp.eq.s32.totalorder %s26, 0
      %p53 = por %p51, %p52
      %s55 = sadd.s32 %s54, 1
      %p58 = scmp.eq.s32.totalorder %s20, 4
      %p59 = scmp.ne.s32.totalorder %s54, %s56
      %p60 = scmp.eq.s32.totalorder %s20, 0
      %p61 = por %p59, %p60
      %p62 = scmp.ne.s32.totalorder %s54, %s56
      %p63 = scmp.eq.s32.totalorder %s25, 4
      %p64 = por %p62, %p63
      %p65 = scmp.ne.s32.totalorder %s56, %s57
      %p66 = scmp.eq.s32.totalorder %s25, 0
      %p67 = por %p65, %p66
      %p68 = scmp.ne.s32.totalorder %s56, %s57
      %p69 = scmp.eq.s32.totalorder %s26, 4
      %p70 = por %p68, %p69
      %p72 = scmp.ne.s32.totalorder %s57, %s71
      %p73 = scmp.eq.s32.totalorder %s26, 0
      %p74 = por %p72, %p73
      %s76 = sadd.s32 %s75, 1
      %p79 = scmp.eq.s32.totalorder %s20, 4
      %p80 = scmp.ne.s32.totalorder %s75, %s77
      %p81 = scmp.eq.s32.totalorder %s20, 0
      %p82 = por %p80, %p81
      %p83 = scmp.ne.s32.totalorder %s75, %s77
      %p84 = scmp.eq.s32.totalorder %s25, 4
      %p85 = por %p83, %p84
      %p86 = scmp.ne.s32.totalorder %s77, %s78
      %p87 = scmp.eq.s32.totalorder %s25, 0
      %p88 = por %p86, %p87
      %p89 = scmp.ne.s32.totalorder %s77, %s78
      %p90 = scmp.eq.s32.totalorder %s26, 4
      %p91 = por %p89, %p90
      %p93 = scmp.ne.s32.totalorder %s78, %s92
      %p94 = scmp.eq.s32.totalorder %s26, 0
      %p95 = por %p93, %p94
      %s97 = sadd.s32 %s96, 1
      %p100 = scmp.eq.s32.totalorder %s20, 4
      %p101 = scmp.ne.s32.totalorder %s96, %s98
      %p102 = scmp.eq.s32.totalorder %s20, 0
      %p103 = por %p101, %p102
      %p104 = scmp.ne.s32.totalorder %s96, %s98
      %p105 = scmp.eq.s32.totalorder %s25, 4
      %p106 = por %p104, %p105
      %p107 = scmp.ne.s32.totalorder %s98, %s99
      %p108 = scmp.eq.s32.totalorder %s25, 0
      %p109 = por %p107, %p108
      %p110 = scmp.ne.s32.totalorder %s98, %s99
      %p111 = scmp.eq.s32.totalorder %s26, 4
      %p112 = por %p110, %p111
      %p114 = scmp.ne.s32.totalorder %s99, %s113
      %p115 = scmp.eq.s32.totalorder %s26, 0
      %p116 = por %p114, %p115
      %s118 = sadd.s32 %s117, 1
      %p121 = scmp.eq.s32.totalorder %s20, 4
      %p122 = scmp.ne.s32.totalorder %s117, %s119
      %p123 = scmp.eq.s32.totalorder %s20, 0
      %p124 = por %p122, %p123
      %p125 = scmp.ne.s32.totalorder %s117, %s119
      %p126 = scmp.eq.s32.totalorder %s25, 4
      %p127 = por %p125, %p126
      %p128 = scmp.ne.s32.totalorder %s119, %s120
      %p129 = scmp.eq.s32.totalorder %s25, 0
      %p130 = por %p128, %p129
      %p131 = scmp.ne.s32.totalorder %s119, %s120
      %p132 = scmp.eq.s32.totalorder %s26, 4
      %p133 = por %p131, %p132
      %p135 = scmp.ne.s32.totalorder %s120, %s134
      %p136 = scmp.eq.s32.totalorder %s26, 0
      %p137 = por %p135, %p136
      %s139 = sadd.s32 %s138, 1
      %p142 = scmp.eq.s32.totalorder %s20, 4
      %p143 = scmp.ne.s32.totalorder %s138, %s140
      %p144 = scmp.eq.s32.totalorder %s20, 0
      %p145 = por %p143, %p144
      %p146 = scmp.ne.s32.totalorder %s138, %s140
      %p147 = scmp.eq.s32.totalorder %s25, 4
      %p148 = por %p146, %p147
      %p149 = scmp.ne.s32.totalorder %s140, %s141
      %p150 = scmp.eq.s32.totalorder %s25, 0
      %p151 = por %p149, %p150
      %p152 = scmp.ne.s32.totalorder %s140, %s141
      %p153 = scmp.eq.s32.totalorder %s26, 4
      %p154 = por %p152, %p153
      %p156 = scmp.ne.s32.totalorder %s141, %s155
      %p157 = scmp.eq.s32.totalorder %s26, 0
      %p158 = por %p156, %p157
      %s160 = sadd.s32 %s159, 1
      %p163 = scmp.eq.s32.totalorder %s20, 4
      %p164 = scmp.ne.s32.totalorder %s159, %s161
      %p165 = scmp.eq.s32.totalorder %s20, 0
      %p166 = por %p164, %p165
      %p167 = scmp.ne.s32.totalorder %s159, %s161
      %p168 = scmp.eq.s32.totalorder %s25, 4
      %p169 = por %p167, %p168
      %p170 = scmp.ne.s32.totalorder %s161, %s162
      %p171 = scmp.eq.s32.totalorder %s25, 0
      %p172 = por %p170, %p171
      %p173 = scmp.ne.s32.totalorder %s161, %s162
      %p174 = scmp.eq.s32.totalorder %s26, 4
      %p175 = por %p173, %p174
      %p177 = scmp.ne.s32.totalorder %s162, %s176
      %p178 = scmp.eq.s32.totalorder %s26, 0
      %p179 = por %p177, %p178
      %s181 = sadd.s32 %s180, 1
      %p184 = scmp.eq.s32.totalorder %s20, 4
      %p185 = scmp.ne.s32.totalorder %s180, %s182
      %p186 = scmp.eq.s32.totalorder %s20, 0
      %p187 = por %p185, %p186
      %p188 = scmp.ne.s32.totalorder %s180, %s182
      %p189 = scmp.eq.s32.totalorder %s25, 4
      %p190 = por %p188, %p189
      %p191 = scmp.ne.s32.totalorder %s182, %s183
      %p192 = scmp.eq.s32.totalorder %s25, 0
      %p193 = por %p191, %p192
      %p194 = scmp.ne.s32.totalorder %s182, %s183
      %p195 = scmp.eq.s32.totalorder %s26, 4
      %p196 = por %p194, %p195
      %p198 = scmp.ne.s32.totalorder %s183, %s197
      %p199 = scmp.eq.s32.totalorder %s26, 0
      %p200 = por %p198, %p199
      %s202 = sadd.s32 %s201, 1
      %p205 = scmp.eq.s32.totalorder %s20, 4
      %p206 = scmp.ne.s32.totalorder %s201, %s203
      %p207 = scmp.eq.s32.totalorder %s20, 0
      %p208 = por %p206, %p207
      %p209 = scmp.ne.s32.totalorder %s201, %s203
      %p210 = scmp.eq.s32.totalorder %s25, 4
      %p211 = por %p209, %p210
      %p212 = scmp.ne.s32.totalorder %s203, %s204
      %p213 = scmp.eq.s32.totalorder %s25, 0
      %p214 = por %p212, %p213
      %p215 = scmp.ne.s32.totalorder %s203, %s204
      %p216 = scmp.eq.s32.totalorder %s26, 4
      %p217 = por %p215, %p216
      %p219 = scmp.ne.s32.totalorder %s204, %s218
      %p220 = scmp.eq.s32.totalorder %s26, 0
      %p221 = por %p219, %p220
      %s222 = ssub.s32 %s20, %s27
      %p223 = scmp.eq.s32.totalorder %s222, 0
      %s225 = sadd.s32 %s224, 1
      %s226 = scalar_select %p223, %s224, %s225
      %p229 = pneg %p223
      %p230 = scmp.eq.s32.totalorder %s20, 4
      %p231 = por %p229, %p230
      %p232 = scmp.ne.s32.totalorder %s224, %s227
      %p233 = scmp.eq.s32.totalorder %s20, 0
      %p234 = por %p232, %p233
      %p235 = scmp.ne.s32.totalorder %s224, %s227
      %p236 = scmp.eq.s32.totalorder %s25, 4
      %p237 = por %p235, %p236
      %p238 = scmp.ne.s32.totalorder %s227, %s228
      %p239 = scmp.eq.s32.totalorder %s25, 0
      %p240 = por %p238, %p239
      %p241 = scmp.ne.s32.totalorder %s227, %s228
      %p242 = scmp.eq.s32.totalorder %s26, 4
      %p243 = por %p241, %p242
      %p245 = scmp.ne.s32.totalorder %s228, %s244
      %p246 = scmp.eq.s32.totalorder %s26, 0
      %p247 = por %p245, %p246
      %p248 = scmp.le.s32.totalorder 1, %s20
      %p249 = scmp.lt.s32.totalorder %s20, 6
      %p250 = pnand %p248, %p249
      %p251 = pneg %p250
      // Predicated region
      $region9: #{tpu_custom_call.1} parent=5 // pred_check
        _
      $region10: #{tpu_custom_call.1} parent=5 // pred_check_branch
        %253 = sbr.rel (%p250) target = $region12
      $region11: #{tpu_custom_call.1} parent=5 // pred_region
        %s254 = ssub.s32 %s20, 1
        // Predicated region
        $region13: #{tpu_custom_call.1} parent=11 // pred_check
          %p255 = pneg %p67
        $region14: #{tpu_custom_call.1} parent=11 // pred_check_branch
          %257 = sbr.rel (%p255) target = $region16
        $region15: #{tpu_custom_call.1} parent=11 // pred_region
          _
        $region16: #{tpu_custom_call.1} parent=11 // pred_fallthru
          _
        // Predicated region
        $region17: #{tpu_custom_call.1} parent=11 // pred_check
          %p258 = pneg %p88
        $region18: #{tpu_custom_call.1} parent=11 // pred_check_branch
          %260 = sbr.rel (%p258) target = $region20
        $region19: #{tpu_custom_call.1} parent=11 // pred_region
          _
        $region20: #{tpu_custom_call.1} parent=11 // pred_fallthru
          _
        // Predicated region
        $region21: #{tpu_custom_call.1} parent=11 // pred_check
          %p261 = pneg %p109
        $region22: #{tpu_custom_call.1} parent=11 // pred_check_branch
          %263 = sbr.rel (%p261) target = $region24
        $region23: #{tpu_custom_call.1} parent=11 // pred_region
          _
        $region24: #{tpu_custom_call.1} parent=11 // pred_fallthru
          _
        // Predicated region
        $region25: #{tpu_custom_call.1} parent=11 // pred_check
          %p264 = pneg %p130
        $region26: #{tpu_custom_call.1} parent=11 // pred_check_branch
          %266 = sbr.rel (%p264) target = $region28
        $region27: #{tpu_custom_call.1} parent=11 // pred_region
          _
        $region28: #{tpu_custom_call.1} parent=11 // pred_fallthru
          _
        // Predicated region
        $region29: #{tpu_custom_call.1} parent=11 // pred_check
          %p267 = pneg %p151
        $region30: #{tpu_custom_call.1} parent=11 // pred_check_branch
          %269 = sbr.rel (%p267) target = $region32
        $region31: #{tpu_custom_call.1} parent=11 // pred_region
          _
        $region32: #{tpu_custom_call.1} parent=11 // pred_fallthru
          _
        // Predicated region
        $region33: #{tpu_custom_call.1} parent=11 // pred_check
          %p270 = pneg %p172
        $region34: #{tpu_custom_call.1} parent=11 // pred_check_branch
          %272 = sbr.rel (%p270) target = $region36
        $region35: #{tpu_custom_call.1} parent=11 // pred_region
          _
        $region36: #{tpu_custom_call.1} parent=11 // pred_fallthru
          _
        // Predicated region
        $region37: #{tpu_custom_call.1} parent=11 // pred_check
          %p273 = pneg %p193
        $region38: #{tpu_custom_call.1} parent=11 // pred_check_branch
          %275 = sbr.rel (%p273) target = $region40
        $region39: #{tpu_custom_call.1} parent=11 // pred_region
          _
        $region40: #{tpu_custom_call.1} parent=11 // pred_fallthru
          _
        // Predicated region
        $region41: #{tpu_custom_call.1} parent=11 // pred_check
          %p276 = pneg %p214
        $region42: #{tpu_custom_call.1} parent=11 // pred_check_branch
          %278 = sbr.rel (%p276) target = $region44
        $region43: #{tpu_custom_call.1} parent=11 // pred_region
          _
        $region44: #{tpu_custom_call.1} parent=11 // pred_fallthru
          _
      $region12: #{tpu_custom_call.1} parent=5 // pred_fallthru
        _
      %p279 = scmp.lt.s32.totalorder %s20, 5
      // Predicated region
      $region45: #{tpu_custom_call.1} parent=5 // pred_check
        %p280 = pneg %p279
      $region46: #{tpu_custom_call.1} parent=5 // pred_check_branch
        %282 = sbr.rel (%p280) target = $region48
      $region47: #{tpu_custom_call.1} parent=5 // pred_region
        // Predicated region
        $region49: #{tpu_custom_call.1} parent=47 // pred_check
          %p283 = pneg %p40
        $region50: #{tpu_custom_call.1} parent=47 // pred_check_branch
          %285 = sbr.rel (%p283) target = $region52
        $region51: #{tpu_custom_call.1} parent=47 // pred_region
          %s286 = sand.u32 %s30, 1
          %s287 = sand.u32 %s30, 1
          %s288 = smul.addr %s287, 32
          %s289 = scalar_lea.vmem [#allocation3], %s288
          %s290 = smul.u32 4, %s20
          %s291 = smul.addr %s290, 4
          %s292 = scalar_lea.vmem %s0, %s291
          // Predicated region
          $region53: #{tpu_custom_call.1} parent=51 // pred_check
            _
          $region54: #{tpu_custom_call.1} parent=51 // pred_check_branch
            %294 = sbr.rel (0) target = $region56
          $region55: #{tpu_custom_call.1} parent=51 // pred_region
            // Predicated region
            $region57: #{tpu_custom_call.1} parent=55 // pred_check
              _
            $region58: #{tpu_custom_call.1} parent=55 // pred_check_branch
              %296 = sbr.rel (0) target = $region60
            $region59: #{tpu_custom_call.1} parent=55 // pred_region
              loop: start=0, step=1, limit=1
              $region61: #{tpu_custom_call.1} parent=59 // loop_pre_header
                _
              $region62: #{tpu_custom_call.1} parent=59 // loop_header
                %s298 = sphi 0, %s302
                %p299 = scmp.ge.s32.totalorder %s298, 1
                %s303 = sphi %s292, %s292
                %s304 = sphi %s289, %s289
              $region63: #{tpu_custom_call.1} parent=59 // loop_header_branch
                %301 = sbr.rel (%p299) target = $region67
              $region64: #{tpu_custom_call.1} parent=59 // loop_body
                %v305 = vld [vmem:[%s303] sm:$0xff]
                %306 = vst [vmem:[%s304] sm:$0xff] %v305
                %v307 = vld [vmem:[%s303 + $0x8] sm:$0xff]
                %308 = vst [vmem:[%s304 + $0x8] sm:$0xff] %v307
                %v309 = vld [vmem:[%s303 + $0x50] sm:$0xff]
                %310 = vst [vmem:[%s304 + $0x10] sm:$0xff] %v309
                %v311 = vld [vmem:[%s303 + $0x58] sm:$0xff]
                %312 = vst [vmem:[%s304 + $0x18] sm:$0xff] %v311
              $region65: #{tpu_custom_call.1} parent=59 // loop_footer
                %s302 = sadd.s32 1, %s298
              $region66: #{tpu_custom_call.1} parent=59 // loop_footer_branch
                %297 = sbr.rel target = $region62
              $region67: #{tpu_custom_call.1} parent=59 // loop_exit
                _
            $region60: #{tpu_custom_call.1} parent=55 // pred_fallthru
              _
            // Predicated region
            $region68: #{tpu_custom_call.1} parent=55 // pred_check
              _
            $region69: #{tpu_custom_call.1} parent=55 // pred_check_branch
              %314 = sbr.rel target = $region71
            $region70: #{tpu_custom_call.1} parent=55 // pred_region
              _
            $region71: #{tpu_custom_call.1} parent=55 // pred_fallthru
              _
          $region56: #{tpu_custom_call.1} parent=51 // pred_fallthru
            _
          %315 = vnop
        $region52: #{tpu_custom_call.1} parent=47 // pred_fallthru
          _
      $region48: #{tpu_custom_call.1} parent=5 // pred_fallthru
        _
      %p316 = scmp.le.s32.totalorder 1, %s20
      %p317 = scmp.lt.s32.totalorder %s20, 6
      %p318 = pnand %p316, %p317
      %p319 = pneg %p318
      // Predicated region
      $region72: #{tpu_custom_call.1} parent=5 // pred_check
        _
      $region73: #{tpu_custom_call.1} parent=5 // pred_check_branch
        %321 = sbr.rel (%p318) target = $region75
      $region74: #{tpu_custom_call.1} parent=5 // pred_region
        %s322 = ssub.s32 %s20, 1
        %s323 = sand.u32 %s33, 1
        %s324 = sand.u32 %s33, 1
        %s325 = smul.addr %s324, 32
        %s326 = scalar_lea.vmem [#allocation3], %s325
        // Predicated region
        $region76: #{tpu_custom_call.1} parent=74 // pred_check
          %p327 = pneg %p46
        $region77: #{tpu_custom_call.1} parent=74 // pred_check_branch
          %329 = sbr.rel (%p327) target = $region79
        $region78: #{tpu_custom_call.1} parent=74 // pred_region
          _
        $region79: #{tpu_custom_call.1} parent=74 // pred_fallthru
          _
        %s330 = sand.u32 %s33, 1
        %s331 = sand.u32 %s33, 1
        %s332 = smul.addr %s331, 32
        %s333 = scalar_lea.vmem [#allocation3], %s332
        %p334 = pneg %p46
        %p335 = pneg %p43
        %p336 = pneg %p67
        %p337 = pneg %p64
        %p338 = pneg %p88
        %p339 = pneg %p85
        %p340 = pneg %p109
        %p341 = pneg %p106
        %p342 = pneg %p130
        %p343 = pneg %p127
        %p344 = pneg %p151
        %p345 = pneg %p148
        %p346 = pneg %p172
        %p347 = pneg %p169
        %p348 = pneg %p193
        %p349 = pneg %p190
        %p350 = pneg %p214
        %p351 = pneg %p211
        %p352 = pneg %p240
        %p353 = pneg %p237
        %s354 = sand.u32 %s227, 1
        %s355 = scalar_lea.sflag [#allocation5], %s354
        %s356 = sand.u32 %s227, 1
        %s357 = smul.addr %s356, 4
        %s358 = scalar_lea.vmem [#allocation4], %s357
        %s359 = smul.u32 4, %s25
        %s360 = smul.u32 4, %s25
        %v362 = vld [vmem:[%s326] sm:$0xff]
        %v363 = vld [vmem:[%s326 + $0x8] sm:$0xff]
        %v364 = vld [vmem:[%s326 + $0x10] sm:$0x33]
        %v365 = vld [vmem:[%s326 + $0x18] sm:$0x33]
        %v366 = vld [vmem:[%s1] sm:$0xf]
        %v367 = vld [vmem:[%s1 + $0x4] sm:$0xf]
        %v368 = vld [vmem:[%s1 + $0x8] sm:$0xf]
        %v369 = vld [vmem:[%s1 + $0xc] sm:$0xf]
        %v370 = vld [vmem:[%s1 + $0x10] sm:$0xf]
        %v371 = vld [vmem:[%s1 + $0x14] sm:$0xf]
        %v372 = vld [vmem:[%s1 + $0x18] sm:$0xf]
        %v373 = vld [vmem:[%s1 + $0x1c] sm:$0xf]
        %v374 = vld [vmem:[%s1 + $0x20] sm:$0xf]
        %v375 = vld [vmem:[%s1 + $0x24] sm:$0xf]
        %v376 = vld [vmem:[%s1 + $0x28] sm:$0xf]
        %v377 = vld [vmem:[%s1 + $0x2c] sm:$0xf]
        %v378 = vld [vmem:[%s1 + $0x30] sm:$0xf]
        %v379 = vld [vmem:[%s1 + $0x34] sm:$0xf]
        %v380 = vld [vmem:[%s1 + $0x38] sm:$0xf]
        %v381 = vld [vmem:[%s1 + $0x3c] sm:$0xf]
        %v382 = vld [vmem:[%s2] sm:$0xff]
        %v383 = vld [vmem:[%s2 + $0x8] sm:$0xff]
        %v384 = vld [vmem:[%s2 + $0x10] sm:$0xff]
        %v385 = vld [vmem:[%s2 + $0x18] sm:$0xff]
        %v386 = vld [vmem:[%s2 + $0x20] sm:$0xff]
        %v387 = vld [vmem:[%s2 + $0x28] sm:$0xff]
        %v388 = vld [vmem:[%s2 + $0x30] sm:$0xff]
        %v389 = vld [vmem:[%s2 + $0x38] sm:$0xff]
        %v390 = vld [vmem:[%s2 + $0x40] sm:$0xff]
        %v391 = vld [vmem:[%s2 + $0x48] sm:$0xff]
        %v392 = vld [vmem:[%s2 + $0x50] sm:$0xff]
        %v393 = vld [vmem:[%s2 + $0x58] sm:$0xff]
        %v394 = vld [vmem:[%s2 + $0x60] sm:$0xff]
        %v395 = vld [vmem:[%s2 + $0x68] sm:$0xff]
        %v396 = vld [vmem:[%s2 + $0x70] sm:$0xff]
        %v397 = vld [vmem:[%s2 + $0x78] sm:$0xff]
        %399 = vset.pattern.permute.xlu0 0
        %400 = vperm.xlu0 %399, %v382
        %v401 = vpop.permute.xlu0 %400
        %404 = vset.pattern.permute.xlu0 0
        %405 = vperm.xlu0 %404, %v383
        %v406 = vpop.permute.xlu0 %405
        %409 = vset.pattern.permute.xlu0 0
        %410 = vperm.xlu0 %409, %v384
        %v411 = vpop.permute.xlu0 %410
        %414 = vset.pattern.permute.xlu0 0
        %415 = vperm.xlu0 %414, %v385
        %v416 = vpop.permute.xlu0 %415
        %419 = vset.pattern.permute.xlu0 0
        %420 = vperm.xlu0 %419, %v386
        %v421 = vpop.permute.xlu0 %420
        %424 = vset.pattern.permute.xlu0 0
        %425 = vperm.xlu0 %424, %v387
        %v426 = vpop.permute.xlu0 %425
        %429 = vset.pattern.permute.xlu0 0
        %430 = vperm.xlu0 %429, %v388
        %v431 = vpop.permute.xlu0 %430
        %434 = vset.pattern.permute.xlu0 0
        %435 = vperm.xlu0 %434, %v389
        %v436 = vpop.permute.xlu0 %435
        %439 = vset.pattern.permute.xlu0 0
        %440 = vperm.xlu0 %439, %v390
        %v441 = vpop.permute.xlu0 %440
        %444 = vset.pattern.permute.xlu0 0
        %445 = vperm.xlu0 %444, %v391
        %v446 = vpop.permute.xlu0 %445
        %449 = vset.pattern.permute.xlu0 0
        %450 = vperm.xlu0 %449, %v392
        %v451 = vpop.permute.xlu0 %450
        %454 = vset.pattern.permute.xlu0 0
        %455 = vperm.xlu0 %454, %v393
        %v456 = vpop.permute.xlu0 %455
        %459 = vset.pattern.permute.xlu0 0
        %460 = vperm.xlu0 %459, %v394
        %v461 = vpop.permute.xlu0 %460
        %464 = vset.pattern.permute.xlu0 0
        %465 = vperm.xlu0 %464, %v395
        %v466 = vpop.permute.xlu0 %465
        %469 = vset.pattern.permute.xlu0 0
        %470 = vperm.xlu0 %469, %v396
        %v471 = vpop.permute.xlu0 %470
        %474 = vset.pattern.permute.xlu0 0
        %475 = vperm.xlu0 %474, %v397
        %v476 = vpop.permute.xlu0 %475
        %v494 = vunpack.c.l.b16 %v366
        %v495 = vunpack.c.l.b16 %v367
        %v496 = vunpack.c.l.b16 %v368
        %v497 = vunpack.c.l.b16 %v369
        %v498 = vunpack.c.l.b16 %v370
        %v499 = vunpack.c.l.b16 %v371
        %v500 = vunpack.c.l.b16 %v372
        %v501 = vunpack.c.l.b16 %v373
        %v502 = vunpack.c.l.b16 %v374
        %v503 = vunpack.c.l.b16 %v375
        %v504 = vunpack.c.l.b16 %v376
        %v505 = vunpack.c.l.b16 %v377
        %v506 = vunpack.c.l.b16 %v378
        %v507 = vunpack.c.l.b16 %v379
        %v508 = vunpack.c.l.b16 %v380
        %v509 = vunpack.c.l.b16 %v381
        %v510 = vpack.c.b16 %v495, %v494
        %v511 = vpack.c.b16 %v497, %v496
        %v512 = vpack.c.b16 %v499, %v498
        %v513 = vpack.c.b16 %v501, %v500
        %v514 = vpack.c.b16 %v503, %v502
        %v515 = vpack.c.b16 %v505, %v504
        %v516 = vpack.c.b16 %v507, %v506
        %v517 = vpack.c.b16 %v509, %v508
        %v522 = vunpack.c.l.b16 %v362
        %v523 = vunpack.c.h.b16 %v362
        %v524 = vunpack.c.l.b16 %v363
        %v525 = vunpack.c.h.b16 %v363
        %v526 = vunpack.c.l.b16 %v364
        %v527 = vunpack.c.h.b16 %v364
        %v528 = vunpack.c.l.b16 %v365
        %v529 = vunpack.c.h.b16 %v365
        %v530 = vpack.c.b16 %v526, %v522
        %v531 = vpack.c.b16 %v527, %v523
        %v532 = vpack.c.b16 %v528, %v524
        %v533 = vpack.c.b16 %v529, %v525
        %vm534 = vcmask 89088
        %v536 = vsel %vm534, %v510, 0
        %v539 = vsel %vm534, %v511, 0
        %v542 = vsel %vm534, %v512, 0
        %v545 = vsel %vm534, %v513, 0
        %v548 = vsel %vm534, %v514, 0
        %v551 = vsel %vm534, %v515, 0
        %v554 = vsel %vm534, %v516, 0
        %v557 = vsel %vm534, %v517, 0
        %vm559 = vcmask 1044480
        %vm560 = vcmask 1045504
        %v561 = vsel %vm559, 4294967295, 65535
        %v562 = vsel %vm560, %v561, 0
        %v564 = vand.u32 %v530, %v562
        %v567 = vand.u32 %v531, %v562
        %v570 = vand.u32 %v532, %v562
        %v573 = vand.u32 %v533, %v562
        %575 = vmatpush.bf16.msra.mxu0 0
        %576 = vmatpush.bf16.msra.mxu0 0
        %577 = vmatpush.bf16.msra.mxu0 0
        %578 = vmatpush.bf16.msra.mxu0 0
        %579 = vmatpush.bf16.msra.mxu0 0
        %580 = vmatpush.bf16.msra.mxu0 0
        %581 = vmatpush.bf16.msra.mxu0 0
        %582 = vmatpush.bf16.msra.mxu0 %v564
        %583 = vmatmul.bf16.gmra.mxu0 %v536
        %v584 = vpop.f32.mrf.mxu0
        %v585 = vadd.f32 %v401, %v584
        %v586 = vpop.f32.mrf.mxu0
        %v587 = vadd.f32 %v406, %v586
        %588 = vmatmul.bf16.gmra.mxu0 %v539
        %v589 = vpop.f32.mrf.mxu0
        %v590 = vadd.f32 %v411, %v589
        %v591 = vpop.f32.mrf.mxu0
        %v592 = vadd.f32 %v416, %v591
        %593 = vmatmul.bf16.gmra.mxu0 %v542
        %v594 = vpop.f32.mrf.mxu0
        %v595 = vadd.f32 %v421, %v594
        %v596 = vpop.f32.mrf.mxu0
        %v597 = vadd.f32 %v426, %v596
        %598 = vmatmul.bf16.gmra.mxu0 %v545
        %v599 = vpop.f32.mrf.mxu0
        %v600 = vadd.f32 %v431, %v599
        %v601 = vpop.f32.mrf.mxu0
        %v602 = vadd.f32 %v436, %v601
        %603 = vmatmul.bf16.gmra.mxu0 %v548
        %v604 = vpop.f32.mrf.mxu0
        %v605 = vadd.f32 %v441, %v604
        %v606 = vpop.f32.mrf.mxu0
        %v607 = vadd.f32 %v446, %v606
        %608 = vmatmul.bf16.gmra.mxu0 %v551
        %v609 = vpop.f32.mrf.mxu0
        %v610 = vadd.f32 %v451, %v609
        %v611 = vpop.f32.mrf.mxu0
        %v612 = vadd.f32 %v456, %v611
        %613 = vmatmul.bf16.gmra.mxu0 %v554
        %v614 = vpop.f32.mrf.mxu0
        %v615 = vadd.f32 %v461, %v614
        %v616 = vpop.f32.mrf.mxu0
        %v617 = vadd.f32 %v466, %v616
        %618 = vmatmul.bf16.gmra.mxu0 %v557
        %v619 = vpop.f32.mrf.mxu0
        %v620 = vadd.f32 %v471, %v619
        %v621 = vpop.f32.mrf.mxu0
        %v622 = vadd.f32 %v476, %v621
        %623 = vdwg.mxu0
        %624 = vmatpush.bf16.msra.mxu0 0
        %625 = vmatpush.bf16.msra.mxu0 0
        %626 = vmatpush.bf16.msra.mxu0 0
        %627 = vmatpush.bf16.msra.mxu0 0
        %628 = vmatpush.bf16.msra.mxu0 0
        %629 = vmatpush.bf16.msra.mxu0 0
        %630 = vmatpush.bf16.msra.mxu0 0
        %631 = vmatpush.bf16.msra.mxu0 %v567
        %632 = vmatmul.bf16.gmra.mxu0 %v536
        %v633 = vpop.f32.mrf.mxu0
        %v634 = vadd.f32 %v401, %v633
        %v635 = vpop.f32.mrf.mxu0
        %v636 = vadd.f32 %v406, %v635
        %637 = vmatmul.bf16.gmra.mxu0 %v539
        %v638 = vpop.f32.mrf.mxu0
        %v639 = vadd.f32 %v411, %v638
        %v640 = vpop.f32.mrf.mxu0
        %v641 = vadd.f32 %v416, %v640
        %642 = vmatmul.bf16.gmra.mxu0 %v542
        %v643 = vpop.f32.mrf.mxu0
        %v644 = vadd.f32 %v421, %v643
        %v645 = vpop.f32.mrf.mxu0
        %v646 = vadd.f32 %v426, %v645
        %647 = vmatmul.bf16.gmra.mxu0 %v545
        %v648 = vpop.f32.mrf.mxu0
        %v649 = vadd.f32 %v431, %v648
        %v650 = vpop.f32.mrf.mxu0
        %v651 = vadd.f32 %v436, %v650
        %652 = vmatmul.bf16.gmra.mxu0 %v548
        %v653 = vpop.f32.mrf.mxu0
        %v654 = vadd.f32 %v441, %v653
        %v655 = vpop.f32.mrf.mxu0
        %v656 = vadd.f32 %v446, %v655
        %657 = vmatmul.bf16.gmra.mxu0 %v551
        %v658 = vpop.f32.mrf.mxu0
        %v659 = vadd.f32 %v451, %v658
        %v660 = vpop.f32.mrf.mxu0
        %v661 = vadd.f32 %v456, %v660
        %662 = vmatmul.bf16.gmra.mxu0 %v554
        %v663 = vpop.f32.mrf.mxu0
        %v664 = vadd.f32 %v461, %v663
        %v665 = vpop.f32.mrf.mxu0
        %v666 = vadd.f32 %v466, %v665
        %667 = vmatmul.bf16.gmra.mxu0 %v557
        %v668 = vpop.f32.mrf.mxu0
        %v669 = vadd.f32 %v471, %v668
        %v670 = vpop.f32.mrf.mxu0
        %v671 = vadd.f32 %v476, %v670
        %672 = vdwg.mxu0
        %673 = vmatpush.bf16.msra.mxu0 0
        %674 = vmatpush.bf16.msra.mxu0 0
        %675 = vmatpush.bf16.msra.mxu0 0
        %676 = vmatpush.bf16.msra.mxu0 0
        %677 = vmatpush.bf16.msra.mxu0 0
        %678 = vmatpush.bf16.msra.mxu0 0
        %679 = vmatpush.bf16.msra.mxu0 0
        %680 = vmatpush.bf16.msra.mxu0 %v570
        %681 = vmatmul.bf16.gmra.mxu0 %v536
        %v682 = vpop.f32.mrf.mxu0
        %v683 = vadd.f32 %v401, %v682
        %v684 = vpop.f32.mrf.mxu0
        %v685 = vadd.f32 %v406, %v684
        %686 = vmatmul.bf16.gmra.mxu0 %v539
        %v687 = vpop.f32.mrf.mxu0
        %v688 = vadd.f32 %v411, %v687
        %v689 = vpop.f32.mrf.mxu0
        %v690 = vadd.f32 %v416, %v689
        %691 = vmatmul.bf16.gmra.mxu0 %v542
        %v692 = vpop.f32.mrf.mxu0
        %v693 = vadd.f32 %v421, %v692
        %v694 = vpop.f32.mrf.mxu0
        %v695 = vadd.f32 %v426, %v694
        %696 = vmatmul.bf16.gmra.mxu0 %v545
        %v697 = vpop.f32.mrf.mxu0
        %v698 = vadd.f32 %v431, %v697
        %v699 = vpop.f32.mrf.mxu0
        %v700 = vadd.f32 %v436, %v699
        %701 = vmatmul.bf16.gmra.mxu0 %v548
        %v702 = vpop.f32.mrf.mxu0
        %v703 = vadd.f32 %v441, %v702
        %v704 = vpop.f32.mrf.mxu0
        %v705 = vadd.f32 %v446, %v704
        %706 = vmatmul.bf16.gmra.mxu0 %v551
        %v707 = vpop.f32.mrf.mxu0
        %v708 = vadd.f32 %v451, %v707
        %v709 = vpop.f32.mrf.mxu0
        %v710 = vadd.f32 %v456, %v709
        %711 = vmatmul.bf16.gmra.mxu0 %v554
        %v712 = vpop.f32.mrf.mxu0
        %v713 = vadd.f32 %v461, %v712
        %v714 = vpop.f32.mrf.mxu0
        %v715 = vadd.f32 %v466, %v714
        %716 = vmatmul.bf16.gmra.mxu0 %v557
        %v717 = vpop.f32.mrf.mxu0
        %v718 = vadd.f32 %v471, %v717
        %v719 = vpop.f32.mrf.mxu0
        %v720 = vadd.f32 %v476, %v719
        %721 = vdwg.mxu0
        %722 = vmatpush.bf16.msra.mxu0 0
        %723 = vmatpush.bf16.msra.mxu0 0
        %724 = vmatpush.bf16.msra.mxu0 0
        %725 = vmatpush.bf16.msra.mxu0 0
        %726 = vmatpush.bf16.msra.mxu0 0
        %727 = vmatpush.bf16.msra.mxu0 0
        %728 = vmatpush.bf16.msra.mxu0 0
        %729 = vmatpush.bf16.msra.mxu0 %v573
        %730 = vmatmul.bf16.gmra.mxu0 %v536
        %v731 = vpop.f32.mrf.mxu0
        %v732 = vadd.f32 %v401, %v731
        %v733 = vpop.f32.mrf.mxu0
        %v734 = vadd.f32 %v406, %v733
        %735 = vmatmul.bf16.gmra.mxu0 %v539
        %v736 = vpop.f32.mrf.mxu0
        %v737 = vadd.f32 %v411, %v736
        %v738 = vpop.f32.mrf.mxu0
        %v739 = vadd.f32 %v416, %v738
        %740 = vmatmul.bf16.gmra.mxu0 %v542
        %v741 = vpop.f32.mrf.mxu0
        %v742 = vadd.f32 %v421, %v741
        %v743 = vpop.f32.mrf.mxu0
        %v744 = vadd.f32 %v426, %v743
        %745 = vmatmul.bf16.gmra.mxu0 %v545
        %v746 = vpop.f32.mrf.mxu0
        %v747 = vadd.f32 %v431, %v746
        %v748 = vpop.f32.mrf.mxu0
        %v749 = vadd.f32 %v436, %v748
        %750 = vmatmul.bf16.gmra.mxu0 %v548
        %v751 = vpop.f32.mrf.mxu0
        %v752 = vadd.f32 %v441, %v751
        %v753 = vpop.f32.mrf.mxu0
        %v754 = vadd.f32 %v446, %v753
        %755 = vmatmul.bf16.gmra.mxu0 %v551
        %v756 = vpop.f32.mrf.mxu0
        %v757 = vadd.f32 %v451, %v756
        %v758 = vpop.f32.mrf.mxu0
        %v759 = vadd.f32 %v456, %v758
        %760 = vmatmul.bf16.gmra.mxu0 %v554
        %v761 = vpop.f32.mrf.mxu0
        %v762 = vadd.f32 %v461, %v761
        %v763 = vpop.f32.mrf.mxu0
        %v764 = vadd.f32 %v466, %v763
        %765 = vmatmul.bf16.gmra.mxu0 %v557
        %v766 = vpop.f32.mrf.mxu0
        %v767 = vadd.f32 %v471, %v766
        %v768 = vpop.f32.mrf.mxu0
        %v769 = vadd.f32 %v476, %v768
        %770 = vdwg.mxu0
        %v771 = vmax.f32 %v585, 0.0
        %v772 = vmax.f32 %v634, 0.0
        %v773 = vmax.f32 %v683, 0.0
        %v774 = vmax.f32 %v732, 0.0
        %v775 = vmax.f32 %v587, 0.0
        %v776 = vmax.f32 %v636, 0.0
        %v777 = vmax.f32 %v685, 0.0
        %v778 = vmax.f32 %v734, 0.0
        %v779 = vmax.f32 %v590, 0.0
        %v780 = vmax.f32 %v639, 0.0
        %v781 = vmax.f32 %v688, 0.0
        %v782 = vmax.f32 %v737, 0.0
        %v783 = vmax.f32 %v592, 0.0
        %v784 = vmax.f32 %v641, 0.0
        %v785 = vmax.f32 %v690, 0.0
        %v786 = vmax.f32 %v739, 0.0
        %v787 = vmax.f32 %v595, 0.0
        %v788 = vmax.f32 %v644, 0.0
        %v789 = vmax.f32 %v693, 0.0
        %v790 = vmax.f32 %v742, 0.0
        %v791 = vmax.f32 %v597, 0.0
        %v792 = vmax.f32 %v646, 0.0
        %v793 = vmax.f32 %v695, 0.0
        %v794 = vmax.f32 %v744, 0.0
        %v795 = vmax.f32 %v600, 0.0
        %v796 = vmax.f32 %v649, 0.0
        %v797 = vmax.f32 %v698, 0.0
        %v798 = vmax.f32 %v747, 0.0
        %v799 = vmax.f32 %v602, 0.0
        %v800 = vmax.f32 %v651, 0.0
        %v801 = vmax.f32 %v700, 0.0
        %v802 = vmax.f32 %v749, 0.0
        %v803 = vmax.f32 %v605, 0.0
        %v804 = vmax.f32 %v654, 0.0
        %v805 = vmax.f32 %v703, 0.0
        %v806 = vmax.f32 %v752, 0.0
        %v807 = vmax.f32 %v607, 0.0
        %v808 = vmax.f32 %v656, 0.0
        %v809 = vmax.f32 %v705, 0.0
        %v810 = vmax.f32 %v754, 0.0
        %v811 = vmax.f32 %v610, 0.0
        %v812 = vmax.f32 %v659, 0.0
        %v813 = vmax.f32 %v708, 0.0
        %v814 = vmax.f32 %v757, 0.0
        %v815 = vmax.f32 %v612, 0.0
        %v816 = vmax.f32 %v661, 0.0
        %v817 = vmax.f32 %v710, 0.0
        %v818 = vmax.f32 %v759, 0.0
        %v819 = vmax.f32 %v615, 0.0
        %v820 = vmax.f32 %v664, 0.0
        %v821 = vmax.f32 %v713, 0.0
        %v822 = vmax.f32 %v762, 0.0
        %v823 = vmax.f32 %v617, 0.0
        %v824 = vmax.f32 %v666, 0.0
        %v825 = vmax.f32 %v715, 0.0
        %v826 = vmax.f32 %v764, 0.0
        %v827 = vmax.f32 %v620, 0.0
        %v828 = vmax.f32 %v669, 0.0
        %v829 = vmax.f32 %v718, 0.0
        %v830 = vmax.f32 %v767, 0.0
        %v831 = vmax.f32 %v622, 0.0
        %v832 = vmax.f32 %v671, 0.0
        %v833 = vmax.f32 %v720, 0.0
        %v834 = vmax.f32 %v769, 0.0
        %v835 = vld [vmem:[%s3] sm:$0xf]
        %v836 = vld [vmem:[%s3 + $0x4] sm:$0xf]
        %v837 = vld [vmem:[%s3 + $0x8] sm:$0xf]
        %v838 = vld [vmem:[%s3 + $0xc] sm:$0xf]
        %v839 = vld [vmem:[%s3 + $0x10] sm:$0xf]
        %v840 = vld [vmem:[%s3 + $0x14] sm:$0xf]
        %v841 = vld [vmem:[%s3 + $0x18] sm:$0xf]
        %v842 = vld [vmem:[%s3 + $0x1c] sm:$0xf]
        %v843 = vpack.c.bf16 %v775, %v771
        %v844 = vpack.c.bf16 %v776, %v772
        %v845 = vpack.c.bf16 %v777, %v773
        %v846 = vpack.c.bf16 %v778, %v774
        %v847 = vpack.c.bf16 %v783, %v779
        %v848 = vpack.c.bf16 %v784, %v780
        %v849 = vpack.c.bf16 %v785, %v781
        %v850 = vpack.c.bf16 %v786, %v782
        %v851 = vpack.c.bf16 %v791, %v787
        %v852 = vpack.c.bf16 %v792, %v788
        %v853 = vpack.c.bf16 %v793, %v789
        %v854 = vpack.c.bf16 %v794, %v790
        %v855 = vpack.c.bf16 %v799, %v795
        %v856 = vpack.c.bf16 %v800, %v796
        %v857 = vpack.c.bf16 %v801, %v797
        %v858 = vpack.c.bf16 %v802, %v798
        %v859 = vpack.c.bf16 %v807, %v803
        %v860 = vpack.c.bf16 %v808, %v804
        %v861 = vpack.c.bf16 %v809, %v805
        %v862 = vpack.c.bf16 %v810, %v806
        %v863 = vpack.c.bf16 %v815, %v811
        %v864 = vpack.c.bf16 %v816, %v812
        %v865 = vpack.c.bf16 %v817, %v813
        %v866 = vpack.c.bf16 %v818, %v814
        %v867 = vpack.c.bf16 %v823, %v819
        %v868 = vpack.c.bf16 %v824, %v820
        %v869 = vpack.c.bf16 %v825, %v821
        %v870 = vpack.c.bf16 %v826, %v822
        %v871 = vpack.c.bf16 %v831, %v827
        %v872 = vpack.c.bf16 %v832, %v828
        %v873 = vpack.c.bf16 %v833, %v829
        %v874 = vpack.c.bf16 %v834, %v830
        %v875 = vld [vmem:[%s4] sm:$0xff]
        %v876 = vld [vmem:[%s4 + $0x8] sm:$0xff]
        %v877 = vld [vmem:[%s4 + $0x10] sm:$0xff]
        %v878 = vld [vmem:[%s4 + $0x18] sm:$0xff]
        %v879 = vld [vmem:[%s4 + $0x20] sm:$0xff]
        %v880 = vld [vmem:[%s4 + $0x28] sm:$0xff]
        %v881 = vld [vmem:[%s4 + $0x30] sm:$0xff]
        %v882 = vld [vmem:[%s4 + $0x38] sm:$0xff]
        %884 = vset.pattern.permute.xlu0 0
        %885 = vperm.xlu0 %884, %v875
        %v886 = vpop.permute.xlu0 %885
        %889 = vset.pattern.permute.xlu0 0
        %890 = vperm.xlu0 %889, %v876
        %v891 = vpop.permute.xlu0 %890
        %894 = vset.pattern.permute.xlu0 0
        %895 = vperm.xlu0 %894, %v877
        %v896 = vpop.permute.xlu0 %895
        %899 = vset.pattern.permute.xlu0 0
        %900 = vperm.xlu0 %899, %v878
        %v901 = vpop.permute.xlu0 %900
        %904 = vset.pattern.permute.xlu0 0
        %905 = vperm.xlu0 %904, %v879
        %v906 = vpop.permute.xlu0 %905
        %909 = vset.pattern.permute.xlu0 0
        %910 = vperm.xlu0 %909, %v880
        %v911 = vpop.permute.xlu0 %910
        %914 = vset.pattern.permute.xlu0 0
        %915 = vperm.xlu0 %914, %v881
        %v916 = vpop.permute.xlu0 %915
        %919 = vset.pattern.permute.xlu0 0
        %920 = vperm.xlu0 %919, %v882
        %v921 = vpop.permute.xlu0 %920
        %v931 = vunpack.c.l.b16 %v835
        %v932 = vunpack.c.l.b16 %v836
        %v933 = vunpack.c.l.b16 %v837
        %v934 = vunpack.c.l.b16 %v838
        %v935 = vunpack.c.l.b16 %v839
        %v936 = vunpack.c.l.b16 %v840
        %v937 = vunpack.c.l.b16 %v841
        %v938 = vunpack.c.l.b16 %v842
        %v939 = vpack.c.b16 %v932, %v931
        %v940 = vpack.c.b16 %v934, %v933
        %v941 = vpack.c.b16 %v936, %v935
        %v942 = vpack.c.b16 %v938, %v937
        %947 = vmatpush.bf16.msra.mxu0 %v871
        %948 = vmatpush.bf16.msra.mxu0 %v867
        %949 = vmatpush.bf16.msra.mxu0 %v863
        %950 = vmatpush.bf16.msra.mxu0 %v859
        %951 = vmatpush.bf16.msra.mxu0 %v855
        %952 = vmatpush.bf16.msra.mxu0 %v851
        %953 = vmatpush.bf16.msra.mxu0 %v847
        %954 = vmatpush.bf16.msra.mxu0 %v843
        %955 = vmatmul.bf16.gmra.mxu0 %v939
        %v956 = vpop.f32.mrf.mxu0
        %v957 = vadd.f32 %v886, %v956
        %v958 = vpop.f32.mrf.mxu0
        %v959 = vadd.f32 %v891, %v958
        %960 = vmatmul.bf16.gmra.mxu0 %v940
        %v961 = vpop.f32.mrf.mxu0
        %v962 = vadd.f32 %v896, %v961
        %v963 = vpop.f32.mrf.mxu0
        %v964 = vadd.f32 %v901, %v963
        %965 = vmatmul.bf16.gmra.mxu0 %v941
        %v966 = vpop.f32.mrf.mxu0
        %v967 = vadd.f32 %v906, %v966
        %v968 = vpop.f32.mrf.mxu0
        %v969 = vadd.f32 %v911, %v968
        %970 = vmatmul.bf16.gmra.mxu0 %v942
        %v971 = vpop.f32.mrf.mxu0
        %v972 = vadd.f32 %v916, %v971
        %v973 = vpop.f32.mrf.mxu0
        %v974 = vadd.f32 %v921, %v973
        %975 = vdwg.mxu0
        %976 = vmatpush.bf16.msra.mxu0 %v872
        %977 = vmatpush.bf16.msra.mxu0 %v868
        %978 = vmatpush.bf16.msra.mxu0 %v864
        %979 = vmatpush.bf16.msra.mxu0 %v860
        %980 = vmatpush.bf16.msra.mxu0 %v856
        %981 = vmatpush.bf16.msra.mxu0 %v852
        %982 = vmatpush.bf16.msra.mxu0 %v848
        %983 = vmatpush.bf16.msra.mxu0 %v844
        %984 = vmatmul.bf16.gmra.mxu0 %v939
        %v985 = vpop.f32.mrf.mxu0
        %v986 = vadd.f32 %v886, %v985
        %v987 = vpop.f32.mrf.mxu0
        %v988 = vadd.f32 %v891, %v987
        %989 = vmatmul.bf16.gmra.mxu0 %v940
        %v990 = vpop.f32.mrf.mxu0
        %v991 = vadd.f32 %v896, %v990
        %v992 = vpop.f32.mrf.mxu0
        %v993 = vadd.f32 %v901, %v992
        %994 = vmatmul.bf16.gmra.mxu0 %v941
        %v995 = vpop.f32.mrf.mxu0
        %v996 = vadd.f32 %v906, %v995
        %v997 = vpop.f32.mrf.mxu0
        %v998 = vadd.f32 %v911, %v997
        %999 = vmatmul.bf16.gmra.mxu0 %v942
        %v1000 = vpop.f32.mrf.mxu0
        %v1001 = vadd.f32 %v916, %v1000
        %v1002 = vpop.f32.mrf.mxu0
        %v1003 = vadd.f32 %v921, %v1002
        %1004 = vdwg.mxu0
        %1005 = vmatpush.bf16.msra.mxu0 %v873
        %1006 = vmatpush.bf16.msra.mxu0 %v869
        %1007 = vmatpush.bf16.msra.mxu0 %v865
        %1008 = vmatpush.bf16.msra.mxu0 %v861
        %1009 = vmatpush.bf16.msra.mxu0 %v857
        %1010 = vmatpush.bf16.msra.mxu0 %v853
        %1011 = vmatpush.bf16.msra.mxu0 %v849
        %1012 = vmatpush.bf16.msra.mxu0 %v845
        %1013 = vmatmul.bf16.gmra.mxu0 %v939
        %v1014 = vpop.f32.mrf.mxu0
        %v1015 = vadd.f32 %v886, %v1014
        %v1016 = vpop.f32.mrf.mxu0
        %v1017 = vadd.f32 %v891, %v1016
        %1018 = vmatmul.bf16.gmra.mxu0 %v940
        %v1019 = vpop.f32.mrf.mxu0
        %v1020 = vadd.f32 %v896, %v1019
        %v1021 = vpop.f32.mrf.mxu0
        %v1022 = vadd.f32 %v901, %v1021
        %1023 = vmatmul.bf16.gmra.mxu0 %v941
        %v1024 = vpop.f32.mrf.mxu0
        %v1025 = vadd.f32 %v906, %v1024
        %v1026 = vpop.f32.mrf.mxu0
        %v1027 = vadd.f32 %v911, %v1026
        %1028 = vmatmul.bf16.gmra.mxu0 %v942
        %v1029 = vpop.f32.mrf.mxu0
        %v1030 = vadd.f32 %v916, %v1029
        %v1031 = vpop.f32.mrf.mxu0
        %v1032 = vadd.f32 %v921, %v1031
        %1033 = vdwg.mxu0
        %1034 = vmatpush.bf16.msra.mxu0 %v874
        %1035 = vmatpush.bf16.msra.mxu0 %v870
        %1036 = vmatpush.bf16.msra.mxu0 %v866
        %1037 = vmatpush.bf16.msra.mxu0 %v862
        %1038 = vmatpush.bf16.msra.mxu0 %v858
        %1039 = vmatpush.bf16.msra.mxu0 %v854
        %1040 = vmatpush.bf16.msra.mxu0 %v850
        %1041 = vmatpush.bf16.msra.mxu0 %v846
        %1042 = vmatmul.bf16.gmra.mxu0 %v939
        %v1043 = vpop.f32.mrf.mxu0
        %v1044 = vadd.f32 %v886, %v1043
        %v1045 = vpop.f32.mrf.mxu0
        %v1046 = vadd.f32 %v891, %v1045
        %1047 = vmatmul.bf16.gmra.mxu0 %v940
        %v1048 = vpop.f32.mrf.mxu0
        %v1049 = vadd.f32 %v896, %v1048
        %v1050 = vpop.f32.mrf.mxu0
        %v1051 = vadd.f32 %v901, %v1050
        %1052 = vmatmul.bf16.gmra.mxu0 %v941
        %v1053 = vpop.f32.mrf.mxu0
        %v1054 = vadd.f32 %v906, %v1053
        %v1055 = vpop.f32.mrf.mxu0
        %v1056 = vadd.f32 %v911, %v1055
        %1057 = vmatmul.bf16.gmra.mxu0 %v942
        %v1058 = vpop.f32.mrf.mxu0
        %v1059 = vadd.f32 %v916, %v1058
        %v1060 = vpop.f32.mrf.mxu0
        %v1061 = vadd.f32 %v921, %v1060
        %1062 = vdwg.mxu0
        %v1063 = vmax.f32 %v957, 0.0
        %v1064 = vmax.f32 %v986, 0.0
        %v1065 = vmax.f32 %v1015, 0.0
        %v1066 = vmax.f32 %v1044, 0.0
        %v1067 = vmax.f32 %v959, 0.0
        %v1068 = vmax.f32 %v988, 0.0
        %v1069 = vmax.f32 %v1017, 0.0
        %v1070 = vmax.f32 %v1046, 0.0
        %v1071 = vmax.f32 %v962, 0.0
        %v1072 = vmax.f32 %v991, 0.0
        %v1073 = vmax.f32 %v1020, 0.0
        %v1074 = vmax.f32 %v1049, 0.0
        %v1075 = vmax.f32 %v964, 0.0
        %v1076 = vmax.f32 %v993, 0.0
        %v1077 = vmax.f32 %v1022, 0.0
        %v1078 = vmax.f32 %v1051, 0.0
        %v1079 = vmax.f32 %v967, 0.0
        %v1080 = vmax.f32 %v996, 0.0
        %v1081 = vmax.f32 %v1025, 0.0
        %v1082 = vmax.f32 %v1054, 0.0
        %v1083 = vmax.f32 %v969, 0.0
        %v1084 = vmax.f32 %v998, 0.0
        %v1085 = vmax.f32 %v1027, 0.0
        %v1086 = vmax.f32 %v1056, 0.0
        %v1087 = vmax.f32 %v972, 0.0
        %v1088 = vmax.f32 %v1001, 0.0
        %v1089 = vmax.f32 %v1030, 0.0
        %v1090 = vmax.f32 %v1059, 0.0
        %v1091 = vmax.f32 %v974, 0.0
        %v1092 = vmax.f32 %v1003, 0.0
        %v1093 = vmax.f32 %v1032, 0.0
        %v1094 = vmax.f32 %v1061, 0.0
        %v1095 = vld [vmem:[%s5] sm:$0xf]
        %v1096 = vld [vmem:[%s5 + $0x4] sm:$0xf]
        %v1097 = vld [vmem:[%s5 + $0x8] sm:$0xf]
        %v1098 = vld [vmem:[%s5 + $0xc] sm:$0xf]
        %v1099 = vpack.c.bf16 %v1067, %v1063
        %v1100 = vpack.c.bf16 %v1068, %v1064
        %v1101 = vpack.c.bf16 %v1069, %v1065
        %v1102 = vpack.c.bf16 %v1070, %v1066
        %v1103 = vpack.c.bf16 %v1075, %v1071
        %v1104 = vpack.c.bf16 %v1076, %v1072
        %v1105 = vpack.c.bf16 %v1077, %v1073
        %v1106 = vpack.c.bf16 %v1078, %v1074
        %v1107 = vpack.c.bf16 %v1083, %v1079
        %v1108 = vpack.c.bf16 %v1084, %v1080
        %v1109 = vpack.c.bf16 %v1085, %v1081
        %v1110 = vpack.c.bf16 %v1086, %v1082
        %v1111 = vpack.c.bf16 %v1091, %v1087
        %v1112 = vpack.c.bf16 %v1092, %v1088
        %v1113 = vpack.c.bf16 %v1093, %v1089
        %v1114 = vpack.c.bf16 %v1094, %v1090
        %v1115 = vld [vmem:[%s6] sm:$0xff]
        %v1116 = vld [vmem:[%s6 + $0x8] sm:$0xff]
        %v1117 = vld [vmem:[%s6 + $0x10] sm:$0xff]
        %v1118 = vld [vmem:[%s6 + $0x18] sm:$0xff]
        %1120 = vset.pattern.permute.xlu0 0
        %1121 = vperm.xlu0 %1120, %v1115
        %v1122 = vpop.permute.xlu0 %1121
        %1125 = vset.pattern.permute.xlu0 0
        %1126 = vperm.xlu0 %1125, %v1116
        %v1127 = vpop.permute.xlu0 %1126
        %1130 = vset.pattern.permute.xlu0 0
        %1131 = vperm.xlu0 %1130, %v1117
        %v1132 = vpop.permute.xlu0 %1131
        %1135 = vset.pattern.permute.xlu0 0
        %1136 = vperm.xlu0 %1135, %v1118
        %v1137 = vpop.permute.xlu0 %1136
        %v1143 = vunpack.c.l.b16 %v1095
        %v1144 = vunpack.c.l.b16 %v1096
        %v1145 = vunpack.c.l.b16 %v1097
        %v1146 = vunpack.c.l.b16 %v1098
        %v1147 = vpack.c.b16 %v1144, %v1143
        %v1148 = vpack.c.b16 %v1146, %v1145
        %vm1149 = vcmask 523264
        %v1151 = vsel %vm1149, %v1147, 0
        %v1154 = vsel %vm1149, %v1148, 0
        %1156 = vmatpush.bf16.msra.mxu0 0
        %1157 = vmatpush.bf16.msra.mxu0 0
        %1158 = vmatpush.bf16.msra.mxu0 0
        %1159 = vmatpush.bf16.msra.mxu0 0
        %1160 = vmatpush.bf16.msra.mxu0 %v1111
        %1161 = vmatpush.bf16.msra.mxu0 %v1107
        %1162 = vmatpush.bf16.msra.mxu0 %v1103
        %1163 = vmatpush.bf16.msra.mxu0 %v1099
        %1164 = vmatmul.bf16.gmra.mxu0 %v1151
        %v1165 = vpop.f32.mrf.mxu0
        %v1166 = vadd.f32 %v1122, %v1165
        %v1167 = vpop.f32.mrf.mxu0
        %v1168 = vadd.f32 %v1127, %v1167
        %1169 = vmatmul.bf16.gmra.mxu0 %v1154
        %v1170 = vpop.f32.mrf.mxu0
        %v1171 = vadd.f32 %v1132, %v1170
        %v1172 = vpop.f32.mrf.mxu0
        %v1173 = vadd.f32 %v1137, %v1172
        %1174 = vdwg.mxu0
        %1175 = vmatpush.bf16.msra.mxu0 0
        %1176 = vmatpush.bf16.msra.mxu0 0
        %1177 = vmatpush.bf16.msra.mxu0 0
        %1178 = vmatpush.bf16.msra.mxu0 0
        %1179 = vmatpush.bf16.msra.mxu0 %v1112
        %1180 = vmatpush.bf16.msra.mxu0 %v1108
        %1181 = vmatpush.bf16.msra.mxu0 %v1104
        %1182 = vmatpush.bf16.msra.mxu0 %v1100
        %1183 = vmatmul.bf16.gmra.mxu0 %v1151
        %v1184 = vpop.f32.mrf.mxu0
        %v1185 = vadd.f32 %v1122, %v1184
        %v1186 = vpop.f32.mrf.mxu0
        %v1187 = vadd.f32 %v1127, %v1186
        %1188 = vmatmul.bf16.gmra.mxu0 %v1154
        %v1189 = vpop.f32.mrf.mxu0
        %v1190 = vadd.f32 %v1132, %v1189
        %v1191 = vpop.f32.mrf.mxu0
        %v1192 = vadd.f32 %v1137, %v1191
        %1193 = vdwg.mxu0
        %1194 = vmatpush.bf16.msra.mxu0 0
        %1195 = vmatpush.bf16.msra.mxu0 0
        %1196 = vmatpush.bf16.msra.mxu0 0
        %1197 = vmatpush.bf16.msra.mxu0 0
        %1198 = vmatpush.bf16.msra.mxu0 %v1113
        %1199 = vmatpush.bf16.msra.mxu0 %v1109
        %1200 = vmatpush.bf16.msra.mxu0 %v1105
        %1201 = vmatpush.bf16.msra.mxu0 %v1101
        %1202 = vmatmul.bf16.gmra.mxu0 %v1151
        %v1203 = vpop.f32.mrf.mxu0
        %v1204 = vadd.f32 %v1122, %v1203
        %v1205 = vpop.f32.mrf.mxu0
        %v1206 = vadd.f32 %v1127, %v1205
        %1207 = vmatmul.bf16.gmra.mxu0 %v1154
        %v1208 = vpop.f32.mrf.mxu0
        %v1209 = vadd.f32 %v1132, %v1208
        %v1210 = vpop.f32.mrf.mxu0
        %v1211 = vadd.f32 %v1137, %v1210
        %1212 = vdwg.mxu0
        %1213 = vmatpush.bf16.msra.mxu0 0
        %1214 = vmatpush.bf16.msra.mxu0 0
        %1215 = vmatpush.bf16.msra.mxu0 0
        %1216 = vmatpush.bf16.msra.mxu0 0
        %1217 = vmatpush.bf16.msra.mxu0 %v1114
        %1218 = vmatpush.bf16.msra.mxu0 %v1110
        %1219 = vmatpush.bf16.msra.mxu0 %v1106
        %1220 = vmatpush.bf16.msra.mxu0 %v1102
        %1221 = vmatmul.bf16.gmra.mxu0 %v1151
        %v1222 = vpop.f32.mrf.mxu0
        %v1223 = vadd.f32 %v1122, %v1222
        %v1224 = vpop.f32.mrf.mxu0
        %v1225 = vadd.f32 %v1127, %v1224
        %1226 = vmatmul.bf16.gmra.mxu0 %v1154
        %v1227 = vpop.f32.mrf.mxu0
        %v1228 = vadd.f32 %v1132, %v1227
        %v1229 = vpop.f32.mrf.mxu0
        %v1230 = vadd.f32 %v1137, %v1229
        %1231 = vdwg.mxu0
        %v1232 = vmax.f32 %v1166, 0.0
        %v1233 = vmax.f32 %v1185, 0.0
        %v1234 = vmax.f32 %v1204, 0.0
        %v1235 = vmax.f32 %v1223, 0.0
        %v1236 = vmax.f32 %v1168, 0.0
        %v1237 = vmax.f32 %v1187, 0.0
        %v1238 = vmax.f32 %v1206, 0.0
        %v1239 = vmax.f32 %v1225, 0.0
        %v1240 = vmax.f32 %v1171, 0.0
        %v1241 = vmax.f32 %v1190, 0.0
        %v1242 = vmax.f32 %v1209, 0.0
        %v1243 = vmax.f32 %v1228, 0.0
        %v1244 = vmax.f32 %v1173, 0.0
        %v1245 = vmax.f32 %v1192, 0.0
        %v1246 = vmax.f32 %v1211, 0.0
        %v1247 = vmax.f32 %v1230, 0.0
        %v1248 = vld [vmem:[%s7] sm:$0xff]
        %v1249 = vld [vmem:[%s7 + $0x8] sm:$0xff]
        %v1250 = vld [vmem:[%s7 + $0x10] sm:$0xff]
        %v1251 = vld [vmem:[%s7 + $0x18] sm:$0xff]
        %1253 = vset.pattern.permute.xlu0 0
        %1254 = vperm.xlu0 %1253, %v1248
        %v1255 = vpop.permute.xlu0 %1254
        %1258 = vset.pattern.permute.xlu0 0
        %1259 = vperm.xlu0 %1258, %v1249
        %v1260 = vpop.permute.xlu0 %1259
        %1263 = vset.pattern.permute.xlu0 0
        %1264 = vperm.xlu0 %1263, %v1250
        %v1265 = vpop.permute.xlu0 %1264
        %1268 = vset.pattern.permute.xlu0 0
        %1269 = vperm.xlu0 %1268, %v1251
        %v1270 = vpop.permute.xlu0 %1269
        %v1272 = vmul.f32 %v1232, %v1255
        %v1273 = vmul.f32 %v1233, %v1255
        %v1274 = vmul.f32 %v1234, %v1255
        %v1275 = vmul.f32 %v1235, %v1255
        %v1276 = vmul.f32 %v1236, %v1260
        %v1277 = vmul.f32 %v1237, %v1260
        %v1278 = vmul.f32 %v1238, %v1260
        %v1279 = vmul.f32 %v1239, %v1260
        %v1280 = vmul.f32 %v1240, %v1265
        %v1281 = vmul.f32 %v1241, %v1265
        %v1282 = vmul.f32 %v1242, %v1265
        %v1283 = vmul.f32 %v1243, %v1265
        %v1284 = vmul.f32 %v1244, %v1270
        %v1285 = vmul.f32 %v1245, %v1270
        %v1286 = vmul.f32 %v1246, %v1270
        %v1287 = vmul.f32 %v1247, %v1270
        %v1288 = vadd.f32 %v1272, %v1276
        %v1289 = vadd.f32 %v1288, %v1280
        %v1290 = vadd.f32 %v1289, %v1284
        %v1291 = vrot.slane %v1290, 4
        %v1292 = vadd.f32 %v1290, %v1291
        %v1293 = vrot.slane %v1292, 2
        %v1294 = vadd.f32 %v1292, %v1293
        %v1295 = vrot.slane %v1294, 1
        %v1296 = vadd.f32 %v1294, %v1295
        %v1297 = vadd.f32 %v1273, %v1277
        %v1298 = vadd.f32 %v1297, %v1281
        %v1299 = vadd.f32 %v1298, %v1285
        %v1300 = vrot.slane %v1299, 4
        %v1301 = vadd.f32 %v1299, %v1300
        %v1302 = vrot.slane %v1301, 2
        %v1303 = vadd.f32 %v1301, %v1302
        %v1304 = vrot.slane %v1303, 1
        %v1305 = vadd.f32 %v1303, %v1304
        %v1306 = vadd.f32 %v1274, %v1278
        %v1307 = vadd.f32 %v1306, %v1282
        %v1308 = vadd.f32 %v1307, %v1286
        %v1309 = vrot.slane %v1308, 4
        %v1310 = vadd.f32 %v1308, %v1309
        %v1311 = vrot.slane %v1310, 2
        %v1312 = vadd.f32 %v1310, %v1311
        %v1313 = vrot.slane %v1312, 1
        %v1314 = vadd.f32 %v1312, %v1313
        %v1315 = vadd.f32 %v1275, %v1279
        %v1316 = vadd.f32 %v1315, %v1283
        %v1317 = vadd.f32 %v1316, %v1287
        %v1318 = vrot.slane %v1317, 4
        %v1319 = vadd.f32 %v1317, %v1318
        %v1320 = vrot.slane %v1319, 2
        %v1321 = vadd.f32 %v1319, %v1320
        %v1322 = vrot.slane %v1321, 1
        %v1323 = vadd.f32 %v1321, %v1322
        %v1324 = vld [vmem:[#allocation2] sm:$0x1]
        %1326 = vset.pattern.permute.xlu0 0
        %1327 = vperm.xlu0 %1326, %v1324
        %v1328 = vpop.permute.xlu0 %1327
        %v1330 = vperm.slane %v1328, 0
        %v1331 = vadd.f32 %v1296, %v1330
        %v1332 = vadd.f32 %v1305, %v1330
        %v1333 = vadd.f32 %v1314, %v1330
        %v1334 = vadd.f32 %v1323, %v1330
        %v1339 = vrot.slane %v1332, 7
        %v1340 = vrot.slane %v1333, 6
        %v1341 = vrot.slane %v1334, 5
        %vm1342 = vcmask 1040384
        %v1343 = vsel %vm1342, %v1331, %v1339
        %vm1344 = vcmask 1042434
        %v1345 = vsel %vm1344, %v1340, %v1341
        %vm1346 = vcmask 1041408
        %v1347 = vsel %vm1346, %v1343, %v1345
        %v1349 = vlaneseq
        %vm1350 = vcmp.ge.s32.totalorder %v1349, 0
        %vm1351 = vcmp.lt.s32.totalorder %v1349, 512
        %vm1352 = vmand %vm1350, %vm1351
        %1353 = vst.msk [vmem:[%s358] sm:$0xf] %vm1352, %v1347
        %s1354 = sand.u32 %s227, 1
        %s1355 = scalar_lea.sflag [#allocation5], %s1354
        %s1356 = sand.u32 %s227, 1
        %s1357 = smul.addr %s1356, 4
        %s1358 = scalar_lea.vmem [#allocation4], %s1357
        // Predicated region
        $region80: #{tpu_custom_call.1} parent=74 // pred_check
          %p1359 = pneg %p237
        $region81: #{tpu_custom_call.1} parent=74 // pred_check_branch
          %1361 = sbr.rel (%p1359) target = $region83
        $region82: #{tpu_custom_call.1} parent=74 // pred_region
          %s1362 = smul.u32 4, %s25
          %1364 = vsyncadd %s1355, 0
          %s1365 = scalar_lea.hbm %s9, %s1362
          %s1367 = sshll.u32 %s1358, 4
          %s1368 = int_to_ptr.vmem [resolvable:$true] %s1367
          %s1369 = sshll.u32 %s1365, 4
          %s1370 = int_to_ptr.hbm [resolvable:$true] %s1369
          %1372 = dma.vmem_to_hbm [thread:$0]  %s1368, 64, %s1370, %s1355
        $region83: #{tpu_custom_call.1} parent=74 // pred_fallthru
          _
      $region75: #{tpu_custom_call.1} parent=5 // pred_fallthru
        _
      %p1373 = scmp.le.s32.totalorder 2, %s20
      // Predicated region
      $region84: #{tpu_custom_call.1} parent=5 // pred_check
        %p1374 = pneg %p1373
      $region85: #{tpu_custom_call.1} parent=5 // pred_check_branch
        %1376 = sbr.rel (%p1374) target = $region87
      $region86: #{tpu_custom_call.1} parent=5 // pred_region
        %s1377 = ssub.s32 %s20, 2
        // Predicated region
        $region88: #{tpu_custom_call.1} parent=86 // pred_check
          %p1378 = pneg %p243
        $region89: #{tpu_custom_call.1} parent=86 // pred_check_branch
          %1380 = sbr.rel (%p1378) target = $region91
        $region90: #{tpu_custom_call.1} parent=86 // pred_region
          %s1381 = sand.u32 %s228, 1
          %s1382 = scalar_lea.sflag [#allocation5], %s1381
          %s1383 = sand.u32 %s228, 1
          %s1384 = smul.addr %s1383, 4
          %s1385 = scalar_lea.vmem [#allocation4], %s1384
          %1387 = dma.done %s1382, 64
        $region91: #{tpu_custom_call.1} parent=86 // pred_fallthru
          _
      $region87: #{tpu_custom_call.1} parent=5 // pred_fallthru
        _
    $region6: #{tpu_custom_call.1} parent=1 // loop_footer
      %s24 = sadd.s32 1, %s20
    $region7: #{tpu_custom_call.1} parent=1 // loop_footer_branch
      %19 = sbr.rel target = $region3
    $region8: #{tpu_custom_call.1} parent=1 // loop_exit
      _
    %1388 = vsyncpa [#allocation5], 1
    %s1389 = scalar_lea.sflag [#allocation5], 1
    %1390 = vsyncpa %s1389, 1

</llo_original>
